<compile_context>
chip_gen: v7x
topology: tpu7x:2x2x1
jax: 0.10.0
libtpu: 0.0.40
codegen_flags: <defaults>
</compile_context>

<pallas_src>
import functools

import jax
import jax.numpy as jnp
from jax.experimental import pallas as pl
from jax.experimental.pallas import tpu as pltpu

_SELU_ALPHA = 1.6732632423543772
_SELU_SCALE = 1.0507009873554805


def _round_up(v, m):
    return (v + m - 1) // m * m


def _ff_kernel(x_ref, w1_ref, b1_ref, w2_ref, b2_ref, o_ref, acc_ref, *,
               compute_dtype):
    # Grid: (row block i, hidden chunk k).  Output block index is constant over
    # k, so o_ref/acc_ref act as a resident accumulator across the k axis.
    k = pl.program_id(1)

    @pl.when(k == 0)
    def _():
        acc_ref[...] = jnp.zeros_like(acc_ref)

    x = x_ref[...].astype(compute_dtype)

    # Linear1 for this hidden-column chunk; bias add + SELU in f32.
    h = jnp.dot(x, w1_ref[...], preferred_element_type=jnp.float32) + b1_ref[...]

    # SELU: scale * (h if h > 0 else alpha * (exp(h) - 1)).
    # exp is evaluated on the clamped negative side (EUP slot), select on VPU.
    neg = _SELU_ALPHA * (jnp.exp(jnp.minimum(h, 0.0)) - 1.0)
    h = _SELU_SCALE * jnp.where(h > 0.0, h, neg)

    # Linear2 partial product for this hidden chunk, accumulated in f32.
    acc_ref[...] += jnp.dot(h.astype(compute_dtype), w2_ref[...],
                            preferred_element_type=jnp.float32)

    @pl.when(k == pl.num_programs(1) - 1)
    def _():
        o_ref[...] = (acc_ref[...] + b2_ref[...]).astype(o_ref.dtype)


def prepare_params(w1, b1, w2, b2, *, compute_dtype=jnp.bfloat16):
    """One-time weight prep: transpose, lane-pad to a multiple of 128, cast.

    w1, w2 : (E, E) in PyTorch nn.Linear layout (out_features, in_features).
    b1, b2 : (E,).
    """
    E = w1.shape[0]
    Ep = _round_up(E, 128)
    pe = Ep - E
    return {
        "dim": E,
        "compute_dtype": compute_dtype,
        "w1t": jnp.pad(w1.T, ((0, pe), (0, pe))).astype(compute_dtype),  # (Ep, Ep)
        "w2t": jnp.pad(w2.T, ((0, pe), (0, pe))).astype(compute_dtype),  # (Ep, Ep)
        "b1": jnp.pad(b1, (0, pe)).reshape(1, Ep).astype(jnp.float32),
        "b2": jnp.pad(b2, (0, pe)).reshape(1, Ep).astype(jnp.float32),
    }


def feed_forward_prepared(x, params, *, block_rows=512, hidden_block=None):
    """FeedForward forward pass using pre-prepared (transposed/padded) weights."""
    E = params["dim"]
    compute_dtype = params["compute_dtype"]
    w1t, b1, w2t, b2 = params["w1t"], params["b1"], params["w2t"], params["b2"]
    Ep = w1t.shape[0]
    pad_e = Ep - E

    orig_shape = x.shape
    x2 = x.reshape(-1, E)
    M = x2.shape[0]

    # Lane (E) dim must be explicitly zero-padded: garbage lanes would feed the
    # contraction.  The row (M) dim is left ragged; Pallas masks edge writes and
    # garbage rows never mix across rows.
    if pad_e:
        x2 = jnp.pad(x2, ((0, 0), (0, pad_e)))

    tm = _round_up(min(M, block_rows), 16)      # 16: bf16 sublane packing
    num_rows = pl.cdiv(M, tm)

    wbytes = jnp.dtype(w1t.dtype).itemsize
    xbytes = jnp.dtype(x.dtype).itemsize

    # Hidden-dim tile: largest divisor of Ep (multiple of 128) whose streamed,
    # double-buffered weight chunks fit a ~40 MiB budget.  Degenerates to
    # tk == Ep (fully resident weights) for moderate E.
    if hidden_block is None:
        budget = 40 * 1024 * 1024
        n128 = Ep // 128
        tk = 128
        for d in range(1, n128 + 1):
            if n128 % d == 0 and 2 * (2 * Ep * d * 128) * wbytes <= budget:
                tk = d * 128
    else:
        tk = hidden_block
    assert Ep % tk == 0 and tk % 128 == 0
    num_k = Ep // tk

    # Constant-index blocks only need a single VMEM buffer; streamed weight
    # chunks keep default double-buffering so their DMA overlaps compute.
    const_mode = pl.Buffered(1)
    w_mode = const_mode if num_k == 1 else None

    n_wbuf = 1 if num_k == 1 else 2
    vmem_bytes = (
        2 * tm * Ep * xbytes                      # x row block (double-buffered)
        + n_wbuf * (Ep * tk + tk * Ep) * wbytes   # w1t / w2t chunks
        + n_wbuf * 8 * tk * 4 + 8 * Ep * 4        # biases (f32, sublane-padded)
        + 2 * tm * Ep * xbytes                    # output block (double-buffered)
        + tm * Ep * 4                             # f32 accumulator scratch
    )
    vmem_limit = min(max(int(vmem_bytes * 1.25) + (4 << 20), 32 << 20), 100 << 20)

    cost = pl.CostEstimate(
        flops=4 * M * Ep * Ep,                    # two MxEpxEp matmuls
        transcendentals=M * Ep,                   # SELU exp
        bytes_accessed=2 * M * Ep * xbytes + 2 * Ep * Ep * wbytes,
    )

    kernel = functools.partial(_ff_kernel, compute_dtype=compute_dtype)

    out = pl.pallas_call(
        kernel,
        out_shape=jax.ShapeDtypeStruct((M, Ep), x.dtype),
        grid_spec=pltpu.PrefetchScalarGridSpec(
            num_scalar_prefetch=0,
            grid=(num_rows, num_k),
            in_specs=[
                pl.BlockSpec((tm, Ep), lambda i, k: (i, 0)),                         # x rows
                pl.BlockSpec((Ep, tk), lambda i, k: (0, k), pipeline_mode=w_mode),   # w1^T cols
                pl.BlockSpec((1, tk), lambda i, k: (0, k), pipeline_mode=w_mode),    # b1 chunk
                pl.BlockSpec((tk, Ep), lambda i, k: (k, 0), pipeline_mode=w_mode),   # w2^T rows
                pl.BlockSpec((1, Ep), lambda i, k: (0, 0), pipeline_mode=const_mode),# b2
            ],
            out_specs=pl.BlockSpec((tm, Ep), lambda i, k: (i, 0)),
            scratch_shapes=[pltpu.VMEM((tm, Ep), jnp.float32)],
        ),
        compiler_params=pltpu.CompilerParams(
            dimension_semantics=("parallel", "arbitrary"),
            vmem_limit_bytes=vmem_limit,
        ),
        cost_estimate=cost,
    )(x2, w1t, b1, w2t, b2)

    return out[:, :E].reshape(orig_shape)


def feed_forward(x, w1, b1, w2, b2, *, compute_dtype=jnp.bfloat16,
                 block_rows=512, hidden_block=None):
    """Convenience wrapper: prepares weights then runs the kernel.

    For repeated layer invocations, call prepare_params once and reuse it with
    feed_forward_prepared (avoids the per-call transpose/pad/cast).
    """
    params = prepare_params(w1, b1, w2, b2, compute_dtype=compute_dtype)
    return feed_forward_prepared(x, params, block_rows=block_rows,
                                 hidden_block=hidden_block)


def _reference(x, w1, b1, w2, b2):
    """Pure-JAX reference mirroring PyTorch FeedForward.forward (eval mode)."""
    h = jax.nn.selu(jnp.einsum("...e,fe->...f", x, w1) + b1)
    return jnp.einsum("...e,fe->...f", h, w2) + b2


if __name__ == "__main__":
    key = jax.random.PRNGKey(0)
    kx, kw1, kb1, kw2, kb2 = jax.random.split(key, 5)

    # Config 1: small module shapes (batch=2, seq=8, dim=32).
    B, S, E = 2, 8, 32
    x = jax.random.normal(kx, (B, S, E), dtype=jnp.float32)
    w1 = jax.random.normal(kw1, (E, E), dtype=jnp.float32) * (E ** -0.5)
    b1 = 0.1 * jax.random.normal(kb1, (E,), dtype=jnp.float32)
    w2 = jax.random.normal(kw2, (E, E), dtype=jnp.float32) * (E ** -0.5)
    b2 = 0.1 * jax.random.normal(kb2, (E,), dtype=jnp.float32)

    y_ref = _reference(x, w1, b1, w2, b2)

    # f32-compute path (tight tolerance).
    y32 = jax.block_until_ready(
        feed_forward(x, w1, b1, w2, b2, compute_dtype=jnp.float32))
    assert y32.shape == (B, S, E)
    assert jnp.allclose(y32, y_ref, atol=1e-4, rtol=1e-4), float(
        jnp.max(jnp.abs(y32 - y_ref)))

    # Default bf16-operand path (f32 accumulate), tolerance scaled for bf16.
    ybf = jax.block_until_ready(feed_forward(x, w1, b1, w2, b2))
    assert ybf.shape == (B, S, E)
    assert jnp.allclose(ybf, y_ref, atol=3e-2, rtol=3e-2), float(
        jnp.max(jnp.abs(ybf - y_ref)))

    # Config 2: exercise the hidden-dim tiling / accumulation path (E=256, tk=128).
    E2 = 256
    x_b = jax.random.normal(kx, (B, S, E2), dtype=jnp.float32)
    w1b = jax.random.normal(kw1, (E2, E2), dtype=jnp.float32) * (E2 ** -0.5)
    b1b = 0.1 * jax.random.normal(kb1, (E2,), dtype=jnp.float32)
    w2b = jax.random.normal(kw2, (E2, E2), dtype=jnp.float32) * (E2 ** -0.5)
    b2b = 0.1 * jax.random.normal(kb2, (E2,), dtype=jnp.float32)

    y2 = jax.block_until_ready(
        feed_forward(x_b, w1b, b1b, w2b, b2b, compute_dtype=jnp.float32,
                     hidden_block=128))
    y2_ref = _reference(x_b, w1b, b1b, w2b, b2b)
    assert jnp.allclose(y2, y2_ref, atol=1e-4, rtol=1e-4), float(
        jnp.max(jnp.abs(y2 - y2_ref)))

    print("KERNEL_OK")
</pallas_src>

<mosaic_0001>
module attributes {stable_mosaic.version = 11 : i64} {
  func.func @_ff_kernel(%arg0: i32, %arg1: i32, %arg2: memref<16x128xf32, #tpu.memory_space<vmem>>, %arg3: memref<128x128xf32, #tpu.memory_space<vmem>>, %arg4: memref<1x128xf32, #tpu.memory_space<vmem>>, %arg5: memref<128x128xf32, #tpu.memory_space<vmem>>, %arg6: memref<1x128xf32, #tpu.memory_space<vmem>>, %arg7: memref<16x128xf32, #tpu.memory_space<vmem>>, %arg8: memref<16x128xf32, #tpu.memory_space<vmem>>) attributes {dimension_semantics = [#tpu.dimension_semantics<parallel>, #tpu.dimension_semantics<arbitrary>], iteration_bounds = array<i64: 1, 1>, scalar_prefetch = 0 : i64, scratch_operands = 1 : i64, tpu.core_type = #tpu.core_type<tc>, window_params = [{transform_indices = @transform_0, window_bounds = array<i64: 16, 128>}, {pipeline_mode = #tpu.pipeline_mode<synchronous>, transform_indices = @transform_1, window_bounds = array<i64: 128, 128>}, {pipeline_mode = #tpu.pipeline_mode<synchronous>, transform_indices = @transform_2, window_bounds = array<i64: 1, 128>}, {pipeline_mode = #tpu.pipeline_mode<synchronous>, transform_indices = @transform_3, window_bounds = array<i64: 128, 128>}, {pipeline_mode = #tpu.pipeline_mode<synchronous>, transform_indices = @transform_4, window_bounds = array<i64: 1, 128>}, {transform_indices = @transform_5, window_bounds = array<i64: 16, 128>}]} {
    %c0_i32 = arith.constant 0 : i32
    %0 = arith.cmpi eq, %arg1, %c0_i32 : i32
    %1 = arith.extui %0 : i1 to i32
    %c0_i32_0 = arith.constant 0 : i32
    %2 = arith.cmpi ne, %1, %c0_i32_0 : i32
    scf.if %2 {
      %cst_20 = arith.constant 0.000000e+00 : f32
      %29 = vector.broadcast %cst_20 : f32 to vector<16x128xf32>
      %c0_21 = arith.constant 0 : index
      %c0_22 = arith.constant 0 : index
      %30 = vector.load %arg8[%c0_21, %c0_22] : memref<16x128xf32, #tpu.memory_space<vmem>>, vector<16x128xf32>
      tpu.vector_store %arg8[%c0_21, %c0_22], %29 {strides = array<i32>} : memref<16x128xf32, #tpu.memory_space<vmem>>, vector<16x128xf32>,
    } else {
    }
    %c0 = arith.constant 0 : index
    %c0_1 = arith.constant 0 : index
    %3 = vector.load %arg2[%c0, %c0_1] : memref<16x128xf32, #tpu.memory_space<vmem>>, vector<16x128xf32>
    %c0_2 = arith.constant 0 : index
    %c0_3 = arith.constant 0 : index
    %4 = vector.load %arg3[%c0_2, %c0_3] : memref<128x128xf32, #tpu.memory_space<vmem>>, vector<128x128xf32>
    %cst = arith.constant dense<0.000000e+00> : vector<16x128xf32>
    %5 = tpu.matmul %3, %4, %cst {dimension_numbers = #tpu.dot_dimension_numbers<[1], [0], [0], [1], [0, 0, 1, 1], [], []>} : vector<16x128xf32>, vector<128x128xf32>, vector<16x128xf32> -> vector<16x128xf32>
    %c0_4 = arith.constant 0 : index
    %c0_5 = arith.constant 0 : index
    %6 = vector.load %arg4[%c0_4, %c0_5] : memref<1x128xf32, #tpu.memory_space<vmem>>, vector<1x128xf32>
    %7 = vector.broadcast %6 : vector<1x128xf32> to vector<16x128xf32>
    %8 = arith.addf %5, %7 : vector<16x128xf32>
    %cst_6 = arith.constant 0.000000e+00 : f32
    %9 = vector.broadcast %cst_6 : f32 to vector<16x128xf32>
    %10 = arith.minimumf %8, %9 : vector<16x128xf32>
    %11 = math.exp %10 : vector<16x128xf32>
    %cst_7 = arith.constant 1.000000e+00 : f32
    %12 = vector.broadcast %cst_7 : f32 to vector<16x128xf32>
    %13 = arith.subf %11, %12 : vector<16x128xf32>
    %cst_8 = arith.constant 1.67326319 : f32
    %14 = vector.broadcast %cst_8 : f32 to vector<16x128xf32>
    %15 = arith.mulf %14, %13 : vector<16x128xf32>
    %cst_9 = arith.constant 0.000000e+00 : f32
    %16 = vector.broadcast %cst_9 : f32 to vector<16x128xf32>
    %17 = arith.cmpf ogt, %8, %16 : vector<16x128xf32>
    %18 = arith.select %17, %8, %15 : vector<16x128xi1>, vector<16x128xf32>
    %cst_10 = arith.constant 1.05070102 : f32
    %19 = vector.broadcast %cst_10 : f32 to vector<16x128xf32>
    %20 = arith.mulf %19, %18 : vector<16x128xf32>
    %c0_11 = arith.constant 0 : index
    %c0_12 = arith.constant 0 : index
    %21 = vector.load %arg8[%c0_11, %c0_12] : memref<16x128xf32, #tpu.memory_space<vmem>>, vector<16x128xf32>
    %c0_13 = arith.constant 0 : index
    %c0_14 = arith.constant 0 : index
    %22 = vector.load %arg5[%c0_13, %c0_14] : memref<128x128xf32, #tpu.memory_space<vmem>>, vector<128x128xf32>
    %cst_15 = arith.constant dense<0.000000e+00> : vector<16x128xf32>
    %23 = tpu.matmul %20, %22, %cst_15 {dimension_numbers = #tpu.dot_dimension_numbers<[1], [0], [0], [1], [0, 0, 1, 1], [], []>} : vector<16x128xf32>, vector<128x128xf32>, vector<16x128xf32> -> vector<16x128xf32>
    %24 = arith.addf %21, %23 : vector<16x128xf32>
    %c0_16 = arith.constant 0 : index
    %c0_17 = arith.constant 0 : index
    %25 = vector.load %arg8[%c0_16, %c0_17] : memref<16x128xf32, #tpu.memory_space<vmem>>, vector<16x128xf32>
    tpu.vector_store %arg8[%c0_16, %c0_17], %24 {strides = array<i32>} : memref<16x128xf32, #tpu.memory_space<vmem>>, vector<16x128xf32>,
    %c0_i32_18 = arith.constant 0 : i32
    %26 = arith.cmpi eq, %arg1, %c0_i32_18 : i32
    %27 = arith.extui %26 : i1 to i32
    %c0_i32_19 = arith.constant 0 : i32
    %28 = arith.cmpi ne, %27, %c0_i32_19 : i32
    scf.if %28 {
      %c0_20 = arith.constant 0 : index
      %c0_21 = arith.constant 0 : index
      %29 = vector.load %arg8[%c0_20, %c0_21] : memref<16x128xf32, #tpu.memory_space<vmem>>, vector<16x128xf32>
      %c0_22 = arith.constant 0 : index
      %c0_23 = arith.constant 0 : index
      %30 = vector.load %arg6[%c0_22, %c0_23] : memref<1x128xf32, #tpu.memory_space<vmem>>, vector<1x128xf32>
      %31 = vector.broadcast %30 : vector<1x128xf32> to vector<16x128xf32>
      %32 = arith.addf %29, %31 : vector<16x128xf32>
      %c0_24 = arith.constant 0 : index
      %c0_25 = arith.constant 0 : index
      %33 = vector.load %arg7[%c0_24, %c0_25] : memref<16x128xf32, #tpu.memory_space<vmem>>, vector<16x128xf32>
      tpu.vector_store %arg7[%c0_24, %c0_25], %32 {strides = array<i32>} : memref<16x128xf32, #tpu.memory_space<vmem>>, vector<16x128xf32>,
    } else {
    }
    return
  }
  func.func @transform_0(%arg0: i32, %arg1: i32) -> (i32, i32) {
    %c0_i32 = arith.constant 0 : i32
    %c0_i32_0 = arith.constant 0 : i32
    return %arg0, %c0_i32 : i32, i32
  }
  func.func @transform_1(%arg0: i32, %arg1: i32) -> (i32, i32) {
    %c0_i32 = arith.constant 0 : i32
    %c0_i32_0 = arith.constant 0 : i32
    return %c0_i32, %arg1 : i32, i32
  }
  func.func @transform_2(%arg0: i32, %arg1: i32) -> (i32, i32) {
    %c0_i32 = arith.constant 0 : i32
    %c0_i32_0 = arith.constant 0 : i32
    return %c0_i32, %arg1 : i32, i32
  }
  func.func @transform_3(%arg0: i32, %arg1: i32) -> (i32, i32) {
    %c0_i32 = arith.constant 0 : i32
    %c0_i32_0 = arith.constant 0 : i32
    return %arg1, %c0_i32 : i32, i32
  }
  func.func @transform_4(%arg0: i32, %arg1: i32) -> (i32, i32) {
    %c0_i32 = arith.constant 0 : i32
    %c0_i32_0 = arith.constant 0 : i32
    %c0_i32_1 = arith.constant 0 : i32
    return %c0_i32, %c0_i32_0 : i32, i32
  }
  func.func @transform_5(%arg0: i32, %arg1: i32) -> (i32, i32) {
    %c0_i32 = arith.constant 0 : i32
    %c0_i32_0 = arith.constant 0 : i32
    return %arg0, %c0_i32 : i32, i32
  }
}

</mosaic_0001>

<llo_original>
// kernel: tpu_custom_call.1
$region0: #{tpu_custom_call.1}
  #allocation0 [shape = 'u32[]', space=smem, size = 0x4, offset = 0x4, fixed_abs, tag = 'smem constant byte address 0x4 - core index']
  #allocation1 [shape = 'u32[144,128]{1,0:T(1,128)}', space=vmem, size = 0x12000, scoped, tag = 'internal scratch']
  #allocation2 [shape = 'f32[16,128]{1,0:T(8,128)}', space=vmem, size = 0x2000, scoped, tag = 'scratch operand']
  %s0 = inlined_call_operand.hbm [shape: f32[16,128], index: 0, kind: input, shape index: {}]
  %s1 = inlined_call_operand.hbm [shape: f32[128,128], index: 1, kind: input, shape index: {}]
  %s2 = inlined_call_operand.vmem [shape: f32[1,128], index: 2, kind: input, shape index: {}]
  %s3 = inlined_call_operand.hbm [shape: f32[128,128], index: 3, kind: input, shape index: {}]
  %s4 = inlined_call_operand.vmem [shape: f32[1,128], index: 4, kind: input, shape index: {}]
  %s5 = inlined_call_operand.hbm [shape: f32[16,128], index: 5, kind: output, shape index: {}]
  %s6 = sld [smem:[#allocation0]]
  $region50: #{tpu_custom_call.1} parent=0
    _
  %s8 = ssub.s32 1, %s6
  %s9 = scalar_select 0, %s8, %s6
  $region1: #{tpu_custom_call.1} parent=0
    #allocation3 [shape = 'u8[8192]{0}', space=vmem, size = 0x2000, scoped, tag = 'input window, operand 0, single buffered']
    #allocation4 [shape = 's32[1]{0}', space=sflag, size = 0x4, scoped, tag = 'scoped memory for tpu_custom_call.1']
    #allocation5 [shape = 's32[1]{0}', space=sflag, size = 0x4, scoped, tag = 'scoped memory for tpu_custom_call.1']
    #allocation6 [shape = 'u8[65536]{0}', space=vmem, size = 0x10000, scoped, tag = 'input window, operand 1, single buffered']
    #allocation7 [shape = 's32[1]{0}', space=sflag, size = 0x4, scoped, tag = 'scoped memory for tpu_custom_call.1']
    #allocation8 [shape = 'u8[65536]{0}', space=vmem, size = 0x10000, scoped, tag = 'input window, operand 3, single buffered']
    #allocation9 [shape = 'u8[8192]{0}', space=vmem, size = 0x2000, scoped, tag = 'output window, operand 0, single buffered']
    %10 = vsyncpa [#allocation4], 0
    %11 = vsyncpa [#allocation7], 0
    %12 = vsyncpa [#allocation5], 0
    // Predicated region
    $region2: #{tpu_custom_call.1} parent=1 // pred_check
      _
    $region3: #{tpu_custom_call.1} parent=1 // pred_check_branch
      %14 = sbr.rel (0) target = $region5
    $region4: #{tpu_custom_call.1} parent=1 // pred_region
      %s16 = ssub.s32 256, 256
      %17 = vsyncadd [#allocation4], %s16
      %s18 = sshll.u32 [#allocation3], 4
      %s19 = int_to_ptr.vmem [resolvable:$true] %s18
      %24 = dma.hbm_to_vmem [thread:$0]  %s0, 256, %s19, [#allocation4], 128, 128, 8
    $region5: #{tpu_custom_call.1} parent=1 // pred_fallthru
      _
    // Predicated region
    $region6: #{tpu_custom_call.1} parent=1 // pred_check
      _
    $region7: #{tpu_custom_call.1} parent=1 // pred_check_branch
      %26 = sbr.rel (0) target = $region9
    $region8: #{tpu_custom_call.1} parent=1 // pred_region
      %s28 = ssub.s32 2048, 2048
      %29 = vsyncadd [#allocation7], %s28
      %s30 = sshll.u32 [#allocation6], 4
      %s31 = int_to_ptr.vmem [resolvable:$true] %s30
      %36 = dma.hbm_to_vmem [thread:$0]  %s1, 2048, %s31, [#allocation7], 128, 128, 8
    $region9: #{tpu_custom_call.1} parent=1 // pred_fallthru
      _
    // Predicated region
    $region10: #{tpu_custom_call.1} parent=1 // pred_check
      _
    $region11: #{tpu_custom_call.1} parent=1 // pred_check_branch
      %38 = sbr.rel (0) target = $region13
    $region12: #{tpu_custom_call.1} parent=1 // pred_region
      _
    $region13: #{tpu_custom_call.1} parent=1 // pred_fallthru
      _
    // Predicated region
    $region14: #{tpu_custom_call.1} parent=1 // pred_check
      _
    $region15: #{tpu_custom_call.1} parent=1 // pred_check_branch
      %40 = sbr.rel (0) target = $region17
    $region16: #{tpu_custom_call.1} parent=1 // pred_region
      %s42 = ssub.s32 2048, 2048
      %43 = vsyncadd [#allocation7], %s42
      %s44 = sshll.u32 [#allocation8], 4
      %s45 = int_to_ptr.vmem [resolvable:$true] %s44
      %50 = dma.hbm_to_vmem [thread:$0]  %s3, 2048, %s45, [#allocation7], 128, 128, 8
    $region17: #{tpu_custom_call.1} parent=1 // pred_fallthru
      _
    // Predicated region
    $region18: #{tpu_custom_call.1} parent=1 // pred_check
      _
    $region19: #{tpu_custom_call.1} parent=1 // pred_check_branch
      %52 = sbr.rel (0) target = $region21
    $region20: #{tpu_custom_call.1} parent=1 // pred_region
      _
    $region21: #{tpu_custom_call.1} parent=1 // pred_fallthru
      _
    // Predicated region
    $region22: #{tpu_custom_call.1} parent=1 // pred_check
      _
    $region23: #{tpu_custom_call.1} parent=1 // pred_check_branch
      %54 = sbr.rel (0) target = $region25
    $region24: #{tpu_custom_call.1} parent=1 // pred_region
      %55 = dma.done [#allocation4], 256
    $region25: #{tpu_custom_call.1} parent=1 // pred_fallthru
      _
    // Predicated region
    $region26: #{tpu_custom_call.1} parent=1 // pred_check
      _
    $region27: #{tpu_custom_call.1} parent=1 // pred_check_branch
      %57 = sbr.rel (0) target = $region29
    $region28: #{tpu_custom_call.1} parent=1 // pred_region
      %58 = dma.done [#allocation7], 2048
    $region29: #{tpu_custom_call.1} parent=1 // pred_fallthru
      _
    // Predicated region
    $region30: #{tpu_custom_call.1} parent=1 // pred_check
      _
    $region31: #{tpu_custom_call.1} parent=1 // pred_check_branch
      %60 = sbr.rel (0) target = $region33
    $region32: #{tpu_custom_call.1} parent=1 // pred_region
      %61 = dma.done [#allocation7], 2048
    $region33: #{tpu_custom_call.1} parent=1 // pred_fallthru
      _
    %p62 = scmp.eq.s32.totalorder 0, 0
    // Predicated region
    $region34: #{tpu_custom_call.1} parent=1 // pred_check
      %p63 = pneg %p62
    $region35: #{tpu_custom_call.1} parent=1 // pred_check_branch
      %65 = sbr.rel (%p63) target = $region37
    $region36: #{tpu_custom_call.1} parent=1 // pred_region
      %66 = vst [vmem:[#allocation2] sm:$0xff] 0.0
      %67 = vst [vmem:[#allocation2 + $0x8] sm:$0xff] 0.0
    $region37: #{tpu_custom_call.1} parent=1 // pred_fallthru
      _
    %v68 = vld [vmem:[#allocation3] sm:$0xff]
    %v69 = vld [vmem:[#allocation3 + $0x8] sm:$0xff]
    %v70 = vld [vmem:[#allocation6] sm:$0xff]
    %v71 = vld [vmem:[#allocation6 + $0x8] sm:$0xff]
    %v72 = vld [vmem:[#allocation6 + $0x10] sm:$0xff]
    %v73 = vld [vmem:[#allocation6 + $0x18] sm:$0xff]
    %v74 = vld [vmem:[#allocation6 + $0x20] sm:$0xff]
    %v75 = vld [vmem:[#allocation6 + $0x28] sm:$0xff]
    %v76 = vld [vmem:[#allocation6 + $0x30] sm:$0xff]
    %v77 = vld [vmem:[#allocation6 + $0x38] sm:$0xff]
    %v78 = vld [vmem:[#allocation6 + $0x40] sm:$0xff]
    %v79 = vld [vmem:[#allocation6 + $0x48] sm:$0xff]
    %v80 = vld [vmem:[#allocation6 + $0x50] sm:$0xff]
    %v81 = vld [vmem:[#allocation6 + $0x58] sm:$0xff]
    %v82 = vld [vmem:[#allocation6 + $0x60] sm:$0xff]
    %v83 = vld [vmem:[#allocation6 + $0x68] sm:$0xff]
    %v84 = vld [vmem:[#allocation6 + $0x70] sm:$0xff]
    %v85 = vld [vmem:[#allocation6 + $0x78] sm:$0xff]
    %v86 = vld [vmem:[%s2] sm:$0x1]
    %v88 = vlaneseq
    %v89 = vshrl.u32 %v88, 7
    %v90 = vsub.s32 0, %v89
    %v91 = vrot.slane %v86, %v90
    %93 = vmatprep.subr.mxu0 0.0
    %94 = vmatpush1.msra.mxu0 %v70
    %95 = vmatprep.subr.mxu0 0.0
    %96 = vmatpush1.msra.mxu0 %v71
    %97 = vmatprep.subr.mxu0 0.0
    %98 = vmatpush1.msra.mxu0 %v72
    %99 = vmatprep.subr.mxu0 0.0
    %100 = vmatpush1.msra.mxu0 %v73
    %101 = vmatprep.subr.mxu0 0.0
    %102 = vmatpush1.msra.mxu0 %v74
    %103 = vmatprep.subr.mxu0 0.0
    %104 = vmatpush1.msra.mxu0 %v75
    %105 = vmatprep.subr.mxu0 0.0
    %106 = vmatpush1.msra.mxu0 %v76
    %107 = vmatprep.subr.mxu0 0.0
    %108 = vmatpush1.msra.mxu0 %v77
    %109 = vmatprep.subr.mxu0 0.0
    %110 = vmatpush1.msra.mxu0 %v78
    %111 = vmatprep.subr.mxu0 0.0
    %112 = vmatpush1.msra.mxu0 %v79
    %113 = vmatprep.subr.mxu0 0.0
    %114 = vmatpush1.msra.mxu0 %v80
    %115 = vmatprep.subr.mxu0 0.0
    %116 = vmatpush1.msra.mxu0 %v81
    %117 = vmatprep.subr.mxu0 0.0
    %118 = vmatpush1.msra.mxu0 %v82
    %119 = vmatprep.subr.mxu0 0.0
    %120 = vmatpush1.msra.mxu0 %v83
    %121 = vmatprep.subr.mxu0 0.0
    %122 = vmatpush1.msra.mxu0 %v84
    %123 = vmatprep.subr.mxu0 0.0
    %124 = vmatpush1.msra.mxu0 %v85
    %125 = vmatprep.subr.mxu0 0.0
    %126 = vmatpush1.msra.mxu0 0.0
    %127 = vmatprep.subr.mxu0 0.0
    %128 = vmatpush1.msra.mxu0 0.0
    %129 = vmatprep.subr.mxu0 0.0
    %130 = vmatpush1.msra.mxu0 0.0
    %131 = vmatprep.subr.mxu0 0.0
    %132 = vmatpush1.msra.mxu0 0.0
    %133 = vmatprep.subr.mxu0 0.0
    %134 = vmatpush1.msra.mxu0 0.0
    %135 = vmatprep.subr.mxu0 0.0
    %136 = vmatpush1.msra.mxu0 0.0
    %137 = vmatprep.subr.mxu0 0.0
    %138 = vmatpush1.msra.mxu0 0.0
    %139 = vmatprep.subr.mxu0 0.0
    %140 = vmatpush1.msra.mxu0 0.0
    %141 = vmatprep.subr.mxu0 0.0
    %142 = vmatpush1.msra.mxu0 0.0
    %143 = vmatprep.subr.mxu0 0.0
    %144 = vmatpush1.msra.mxu0 0.0
    %145 = vmatprep.subr.mxu0 0.0
    %146 = vmatpush1.msra.mxu0 0.0
    %147 = vmatprep.subr.mxu0 0.0
    %148 = vmatpush1.msra.mxu0 0.0
    %149 = vmatprep.subr.mxu0 0.0
    %150 = vmatpush1.msra.mxu0 0.0
    %151 = vmatprep.subr.mxu0 0.0
    %152 = vmatpush1.msra.mxu0 0.0
    %153 = vmatprep.subr.mxu0 0.0
    %154 = vmatpush1.msra.mxu0 0.0
    %155 = vmatprep.subr.mxu0 0.0
    %156 = vmatpush1.msra.mxu0 0.0
    %157 = vmatprep.mubr.f32.mxu0 0.0
    %158 = vmatmul.mubr.f32.gmra.mrb[0].mxu0 %v68
    %v159 = vpop.f32.mrb[0].mxu0
    %v160 = vadd.f32 %v91, %v159
    %v161 = vpop.f32.mrb[0].mxu0
    %162 = vmatprep.mubr.f32.mxu0 0.0
    %163 = vmatmul.mubr.f32.gmra.mrb[0].mxu0 %v69
    %v164 = vpop.f32.mrb[0].mxu0
    %v165 = vadd.f32 %v91, %v164
    %v166 = vpop.f32.mrb[0].mxu0
    %167 = vdwg.mxu0
    %v168 = vmin.f32 %v160, 0.0
    %v169 = vmin.f32 %v165, 0.0
    %v170 = vmul.f32 %v168, 1.442695
    %v171 = vpow.pop %v170
    %v172 = vmul.f32 %v169, 1.442695
    %v173 = vpow.pop %v172
    %v174 = vsub.f32 %v171, 1.0
    %v175 = vsub.f32 %v173, 1.0
    %v176 = vmul.f32 %v174, 1.6732632
    %v177 = vmul.f32 %v175, 1.6732632
    %vm178 = vcmp.gt.f32.partialorder %v160, 0.0
    %vm179 = vcmp.gt.f32.partialorder %v165, 0.0
    %v180 = vsel %vm178, %v160, %v176
    %v181 = vsel %vm179, %v165, %v177
    %v182 = vmul.f32 %v180, 1.050701
    %v183 = vmul.f32 %v181, 1.050701
    %v184 = vld [vmem:[#allocation2] sm:$0xff]
    %v185 = vld [vmem:[#allocation2 + $0x8] sm:$0xff]
    %v186 = vld [vmem:[#allocation8] sm:$0xff]
    %v187 = vld [vmem:[#allocation8 + $0x8] sm:$0xff]
    %v188 = vld [vmem:[#allocation8 + $0x10] sm:$0xff]
    %v189 = vld [vmem:[#allocation8 + $0x18] sm:$0xff]
    %v190 = vld [vmem:[#allocation8 + $0x20] sm:$0xff]
    %v191 = vld [vmem:[#allocation8 + $0x28] sm:$0xff]
    %v192 = vld [vmem:[#allocation8 + $0x30] sm:$0xff]
    %v193 = vld [vmem:[#allocation8 + $0x38] sm:$0xff]
    %v194 = vld [vmem:[#allocation8 + $0x40] sm:$0xff]
    %v195 = vld [vmem:[#allocation8 + $0x48] sm:$0xff]
    %v196 = vld [vmem:[#allocation8 + $0x50] sm:$0xff]
    %v197 = vld [vmem:[#allocation8 + $0x58] sm:$0xff]
    %v198 = vld [vmem:[#allocation8 + $0x60] sm:$0xff]
    %v199 = vld [vmem:[#allocation8 + $0x68] sm:$0xff]
    %v200 = vld [vmem:[#allocation8 + $0x70] sm:$0xff]
    %v201 = vld [vmem:[#allocation8 + $0x78] sm:$0xff]
    %202 = vmatprep.subr.mxu0 0.0
    %203 = vmatpush1.msra.mxu0 %v186
    %204 = vmatprep.subr.mxu0 0.0
    %205 = vmatpush1.msra.mxu0 %v187
    %206 = vmatprep.subr.mxu0 0.0
    %207 = vmatpush1.msra.mxu0 %v188
    %208 = vmatprep.subr.mxu0 0.0
    %209 = vmatpush1.msra.mxu0 %v189
    %210 = vmatprep.subr.mxu0 0.0
    %211 = vmatpush1.msra.mxu0 %v190
    %212 = vmatprep.subr.mxu0 0.0
    %213 = vmatpush1.msra.mxu0 %v191
    %214 = vmatprep.subr.mxu0 0.0
    %215 = vmatpush1.msra.mxu0 %v192
    %216 = vmatprep.subr.mxu0 0.0
    %217 = vmatpush1.msra.mxu0 %v193
    %218 = vmatprep.subr.mxu0 0.0
    %219 = vmatpush1.msra.mxu0 %v194
    %220 = vmatprep.subr.mxu0 0.0
    %221 = vmatpush1.msra.mxu0 %v195
    %222 = vmatprep.subr.mxu0 0.0
    %223 = vmatpush1.msra.mxu0 %v196
    %224 = vmatprep.subr.mxu0 0.0
    %225 = vmatpush1.msra.mxu0 %v197
    %226 = vmatprep.subr.mxu0 0.0
    %227 = vmatpush1.msra.mxu0 %v198
    %228 = vmatprep.subr.mxu0 0.0
    %229 = vmatpush1.msra.mxu0 %v199
    %230 = vmatprep.subr.mxu0 0.0
    %231 = vmatpush1.msra.mxu0 %v200
    %232 = vmatprep.subr.mxu0 0.0
    %233 = vmatpush1.msra.mxu0 %v201
    %234 = vmatprep.subr.mxu0 0.0
    %235 = vmatpush1.msra.mxu0 0.0
    %236 = vmatprep.subr.mxu0 0.0
    %237 = vmatpush1.msra.mxu0 0.0
    %238 = vmatprep.subr.mxu0 0.0
    %239 = vmatpush1.msra.mxu0 0.0
    %240 = vmatprep.subr.mxu0 0.0
    %241 = vmatpush1.msra.mxu0 0.0
    %242 = vmatprep.subr.mxu0 0.0
    %243 = vmatpush1.msra.mxu0 0.0
    %244 = vmatprep.subr.mxu0 0.0
    %245 = vmatpush1.msra.mxu0 0.0
    %246 = vmatprep.subr.mxu0 0.0
    %247 = vmatpush1.msra.mxu0 0.0
    %248 = vmatprep.subr.mxu0 0.0
    %249 = vmatpush1.msra.mxu0 0.0
    %250 = vmatprep.subr.mxu0 0.0
    %251 = vmatpush1.msra.mxu0 0.0
    %252 = vmatprep.subr.mxu0 0.0
    %253 = vmatpush1.msra.mxu0 0.0
    %254 = vmatprep.subr.mxu0 0.0
    %255 = vmatpush1.msra.mxu0 0.0
    %256 = vmatprep.subr.mxu0 0.0
    %257 = vmatpush1.msra.mxu0 0.0
    %258 = vmatprep.subr.mxu0 0.0
    %259 = vmatpush1.msra.mxu0 0.0
    %260 = vmatprep.subr.mxu0 0.0
    %261 = vmatpush1.msra.mxu0 0.0
    %262 = vmatprep.subr.mxu0 0.0
    %263 = vmatpush1.msra.mxu0 0.0
    %264 = vmatprep.subr.mxu0 0.0
    %265 = vmatpush1.msra.mxu0 0.0
    %266 = vmatprep.mubr.f32.mxu0 0.0
    %267 = vmatmul.mubr.f32.gmra.mrb[0].mxu0 %v182
    %v268 = vpop.f32.mrb[0].mxu0
    %v269 = vadd.f32 0.0, %v268
    %v270 = vpop.f32.mrb[0].mxu0
    %271 = vmatprep.mubr.f32.mxu0 0.0
    %272 = vmatmul.mubr.f32.gmra.mrb[0].mxu0 %v183
    %v273 = vpop.f32.mrb[0].mxu0
    %v274 = vadd.f32 0.0, %v273
    %v275 = vpop.f32.mrb[0].mxu0
    %276 = vdwg.mxu0
    %v277 = vadd.f32 %v184, %v269
    %v278 = vadd.f32 %v185, %v274
    %279 = vst [vmem:[#allocation2] sm:$0xff] %v277
    %280 = vst [vmem:[#allocation2 + $0x8] sm:$0xff] %v278
    // Predicated region
    $region38: #{tpu_custom_call.1} parent=1 // pred_check
      %p281 = pneg %p62
    $region39: #{tpu_custom_call.1} parent=1 // pred_check_branch
      %283 = sbr.rel (%p281) target = $region41
    $region40: #{tpu_custom_call.1} parent=1 // pred_region
      %v284 = vld [vmem:[#allocation2] sm:$0xff]
      %v285 = vld [vmem:[#allocation2 + $0x8] sm:$0xff]
      %v286 = vld [vmem:[%s4] sm:$0x1]
      %v288 = vlaneseq
      %v289 = vshrl.u32 %v288, 7
      %v290 = vsub.s32 0, %v289
      %v291 = vrot.slane %v286, %v290
      %v293 = vadd.f32 %v284, %v291
      %v294 = vadd.f32 %v285, %v291
      %295 = vst [vmem:[#allocation9] sm:$0xff] %v293
      %296 = vst [vmem:[#allocation9 + $0x8] sm:$0xff] %v294
    $region41: #{tpu_custom_call.1} parent=1 // pred_fallthru
      _
    // Predicated region
    $region42: #{tpu_custom_call.1} parent=1 // pred_check
      _
    $region43: #{tpu_custom_call.1} parent=1 // pred_check_branch
      %298 = sbr.rel (0) target = $region45
    $region44: #{tpu_custom_call.1} parent=1 // pred_region
      %s300 = ssub.s32 256, 256
      %301 = vsyncadd [#allocation5], %s300
      %s302 = sshll.u32 [#allocation9], 4
      %s303 = int_to_ptr.vmem [resolvable:$true] %s302
      %308 = dma.vmem_to_hbm [thread:$0]  %s303, 256, %s5, [#allocation5], 128, 128, 8
    $region45: #{tpu_custom_call.1} parent=1 // pred_fallthru
      _
    // Predicated region
    $region46: #{tpu_custom_call.1} parent=1 // pred_check
      _
    $region47: #{tpu_custom_call.1} parent=1 // pred_check_branch
      %310 = sbr.rel (0) target = $region49
    $region48: #{tpu_custom_call.1} parent=1 // pred_region
      %311 = dma.done [#allocation5], 256
    $region49: #{tpu_custom_call.1} parent=1 // pred_fallthru
      _
    %312 = vsyncpa [#allocation4], 1
    %313 = vsyncpa [#allocation7], 1
    %314 = vsyncpa [#allocation5], 1

</llo_original>
